<compile_context>
chip_gen: v6e
topology: v6e:2x2x1
jax: 0.10.0
libtpu: 0.0.40
codegen_flags: <defaults>
</compile_context>

<pallas_src>
import functools

import jax
import jax.numpy as jnp
from jax.experimental import pallas as pl
from jax.experimental.pallas import tpu as pltpu


def _gap_kernel(x_ref, w_ref, o_ref, m_ref, l_ref, acc_ref, *,
                seq_len, block_s, mask_seq):
    # x_ref : (TB, TS, D)  input tile in its original dtype (cast to f32 here)
    # w_ref : (1, D)       lane-dense attention-weight row, f32
    # o_ref : (TB, D)      pooled output tile (resident across the S grid axis)
    # m/l   : (TB, 1) f32  running softmax max / denominator
    # acc   : (TB, D) f32  running weighted sum
    s_idx = pl.program_id(1)

    @pl.when(s_idx == 0)
    def _():
        m_ref[...] = jnp.full(m_ref.shape, -jnp.inf, m_ref.dtype)
        l_ref[...] = jnp.zeros(l_ref.shape, l_ref.dtype)
        acc_ref[...] = jnp.zeros(acc_ref.shape, acc_ref.dtype)

    xb = x_ref[...].astype(jnp.float32)                    # (TB, TS, D)
    w = w_ref[...].astype(jnp.float32)                     # (1, D)

    # scores[b, s] = sum_d x[b, s, d] * w[d]   (lane reduce; pure VPU/XLU work)
    scores = jnp.sum(xb * w[None, :, :], axis=-1)          # (TB, TS)

    if mask_seq:  # ragged final S block: ignore out-of-range sequence positions
        pos = s_idx * block_s + jax.lax.broadcasted_iota(jnp.int32, scores.shape, 1)
        valid = pos < seq_len
        scores = jnp.where(valid, scores, -jnp.inf)

    # online (flash-style) softmax update over the sequence axis
    m_prev = m_ref[...]
    m_new = jnp.maximum(m_prev, jnp.max(scores, axis=-1, keepdims=True))
    alpha = jnp.exp(m_prev - m_new)                        # (TB, 1)  EUP
    e = jnp.exp(scores - m_new)                            # (TB, TS) EUP
    l_ref[...] = alpha * l_ref[...] + jnp.sum(e, axis=-1, keepdims=True)

    contrib = xb * e[:, :, None]                           # (TB, TS, D)
    if mask_seq:  # OOB rows of the DMA'd edge block may hold garbage -> zero them
        contrib = jnp.where(valid[:, :, None], contrib, 0.0)
    acc_ref[...] = alpha * acc_ref[...] + jnp.sum(contrib, axis=1)  # sublane reduce
    m_ref[...] = m_new

    @pl.when(s_idx == pl.num_programs(1) - 1)
    def _():
        # normalisation folded into the pooled result: one divide per (TB, D)
        o_ref[...] = (acc_ref[...] / l_ref[...]).astype(o_ref.dtype)


def _round_up(n, m):
    return ((n + m - 1) // m) * m


def _vmem_capacity_bytes():
    try:
        cap = getattr(pltpu.get_tpu_info(), "vmem_capacity_bytes", None)
        if cap:
            return int(cap)
    except Exception:
        pass
    return 64 << 20   # conservative fallback: v7x per-TensorCore VMEM


def _pick_tiles(B, S, D, itemsize, vmem_limit_bytes):
    """Largest batch tile (multiple of 8) whose working set fits the VMEM budget;
    tile S (online-softmax path) only when even 8 batch rows x full S won't fit."""
    budget = int(vmem_limit_bytes * 0.8)        # headroom for output/scratch/compiler
    # per element: double-buffered input tile + ~2 f32 intermediates in the kernel
    per_elem = 2 * itemsize + 2 * 4

    bb_cap = _round_up(B, 8)
    if B > 8:
        # keep >= 2 batch grid steps so both v7x TensorCores get work
        bb_cap = min(bb_cap, _round_up(-(-B // 2), 8))

    max_bb = (budget // max(1, S * D * per_elem)) // 8 * 8
    block_b = max(8, min(bb_cap, max_bb))
    block_s = S
    if block_b * S * D * per_elem > budget:
        # full-S slab does not fit even for 8 rows -> tile the sequence axis
        # TODO(synk): a D-tiled path would be needed for pathologically large D.
        block_b = 8
        block_s = max(8, (budget // max(1, block_b * D * per_elem)) // 8 * 8)
        block_s = min(block_s, S)
    return block_b, block_s


def global_attention_pooling(x, attention_weights):
    """x: (B, S, D); attention_weights: (D, 1) (PyTorch layout). Returns (B, D)."""
    B, S, D = x.shape
    assert attention_weights.shape == (D, 1), attention_weights.shape

    # (D, 1) parameter -> lane-dense (1, D) f32 row (tiny; negligible HBM traffic).
    w = attention_weights.reshape(1, D).astype(jnp.float32)
    out_dtype = jnp.result_type(x.dtype, attention_weights.dtype)

    vmem_cap = _vmem_capacity_bytes()
    vmem_limit = min(int(vmem_cap * 0.75), 96 << 20)   # ~96 MiB v5e/v6e, ~48 MiB v7x
    block_b, block_s = _pick_tiles(B, S, D, jnp.dtype(x.dtype).itemsize, vmem_limit)

    grid = (pl.cdiv(B, block_b), pl.cdiv(S, block_s))
    kernel = functools.partial(_gap_kernel, seq_len=S, block_s=block_s,
                               mask_seq=(S % block_s != 0))

    return pl.pallas_call(
        kernel,
        out_shape=jax.ShapeDtypeStruct((B, D), out_dtype),
        grid_spec=pltpu.PrefetchScalarGridSpec(
            num_scalar_prefetch=0,
            grid=grid,
            in_specs=[
                pl.BlockSpec((block_b, block_s, D), lambda i, s: (i, s, 0)),
                pl.BlockSpec((1, D), lambda i, s: (0, 0)),
            ],
            out_specs=pl.BlockSpec((block_b, D), lambda i, s: (i, 0)),
            scratch_shapes=[
                pltpu.VMEM((block_b, 1), jnp.float32),   # running max  m
                pltpu.VMEM((block_b, 1), jnp.float32),   # running sum  l
                pltpu.VMEM((block_b, D), jnp.float32),   # running weighted sum
            ],
        ),
        compiler_params=pltpu.CompilerParams(
            # batch tiles independent -> sharded across v7x TensorCores;
            # S axis is the online-softmax reduction -> arbitrary.
            dimension_semantics=("parallel", "arbitrary"),
            vmem_limit_bytes=vmem_limit,
        ),
        cost_estimate=pl.CostEstimate(
            flops=4 * B * S * D,
            transcendentals=B * S,
            bytes_accessed=int(x.size) * x.dtype.itemsize
                           + B * D * jnp.dtype(out_dtype).itemsize
                           + w.size * 4,
        ),
    )(x, w)


def _reference(x, attention_weights):
    scores = jnp.matmul(x, attention_weights)        # (B, S, 1)
    attn = jax.nn.softmax(scores, axis=1)
    return jnp.sum(x * attn, axis=1)                 # (B, D)


if __name__ == "__main__":
    key = jax.random.PRNGKey(0)
    B, S, seq_depth = 8, 16, 32
    kx, kw = jax.random.split(key)
    x = jax.random.normal(kx, (B, S, seq_depth), jnp.float32)
    attention_weights = jax.random.normal(kw, (seq_depth, 1), jnp.float32)  # torch.randn(seq_depth, 1)

    out = global_attention_pooling(x, attention_weights)
    out = jax.block_until_ready(out)

    ref = _reference(x, attention_weights)
    assert out.shape == (B, seq_depth), out.shape
    assert jnp.allclose(out, ref, atol=1e-4, rtol=1e-4), "mismatch vs. reference"

    print("KERNEL_OK")
</pallas_src>

<mosaic_0001>
module attributes {stable_mosaic.version = 11 : i64} {
  func.func @_gap_kernel(%arg0: i32, %arg1: i32, %arg2: memref<8x16x32xf32, #tpu.memory_space<vmem>>, %arg3: memref<1x32xf32, #tpu.memory_space<vmem>>, %arg4: memref<8x32xf32, #tpu.memory_space<vmem>>, %arg5: memref<8x1xf32, #tpu.memory_space<vmem>>, %arg6: memref<8x1xf32, #tpu.memory_space<vmem>>, %arg7: memref<8x32xf32, #tpu.memory_space<vmem>>) attributes {dimension_semantics = [#tpu.dimension_semantics<parallel>, #tpu.dimension_semantics<arbitrary>], iteration_bounds = array<i64: 1, 1>, scalar_prefetch = 0 : i64, scratch_operands = 3 : i64, tpu.core_type = #tpu.core_type<tc>, window_params = [{transform_indices = @transform_0, window_bounds = array<i64: 8, 16, 32>}, {pipeline_mode = #tpu.pipeline_mode<synchronous>, transform_indices = @transform_1, window_bounds = array<i64: 1, 32>}, {transform_indices = @transform_2, window_bounds = array<i64: 8, 32>}]} {
    %c0_i32 = arith.constant 0 : i32
    %0 = arith.cmpi eq, %arg1, %c0_i32 : i32
    %1 = arith.extui %0 : i1 to i32
    %c0_i32_0 = arith.constant 0 : i32
    %2 = arith.cmpi ne, %1, %c0_i32_0 : i32
    scf.if %2 {
      %cst_22 = arith.constant 0xFF800000 : f32
      %37 = vector.broadcast %cst_22 : f32 to vector<8x1xf32>
      %c0_23 = arith.constant 0 : index
      %c0_24 = arith.constant 0 : index
      %38 = vector.load %arg5[%c0_23, %c0_24] : memref<8x1xf32, #tpu.memory_space<vmem>>, vector<8x1xf32>
      tpu.vector_store %arg5[%c0_23, %c0_24], %37 {strides = array<i32>} : memref<8x1xf32, #tpu.memory_space<vmem>>, vector<8x1xf32>,
      %cst_25 = arith.constant 0.000000e+00 : f32
      %39 = vector.broadcast %cst_25 : f32 to vector<8x1xf32>
      %c0_26 = arith.constant 0 : index
      %c0_27 = arith.constant 0 : index
      %40 = vector.load %arg6[%c0_26, %c0_27] : memref<8x1xf32, #tpu.memory_space<vmem>>, vector<8x1xf32>
      tpu.vector_store %arg6[%c0_26, %c0_27], %39 {strides = array<i32>} : memref<8x1xf32, #tpu.memory_space<vmem>>, vector<8x1xf32>,
      %cst_28 = arith.constant 0.000000e+00 : f32
      %41 = vector.broadcast %cst_28 : f32 to vector<8x32xf32>
      %c0_29 = arith.constant 0 : index
      %c0_30 = arith.constant 0 : index
      %42 = vector.load %arg7[%c0_29, %c0_30] : memref<8x32xf32, #tpu.memory_space<vmem>>, vector<8x32xf32>
      tpu.vector_store %arg7[%c0_29, %c0_30], %41 {strides = array<i32>} : memref<8x32xf32, #tpu.memory_space<vmem>>, vector<8x32xf32>,
    } else {
    }
    %c0 = arith.constant 0 : index
    %c0_1 = arith.constant 0 : index
    %c0_2 = arith.constant 0 : index
    %3 = vector.load %arg2[%c0, %c0_1, %c0_2] : memref<8x16x32xf32, #tpu.memory_space<vmem>>, vector<8x16x32xf32>
    %c0_3 = arith.constant 0 : index
    %c0_4 = arith.constant 0 : index
    %4 = vector.load %arg3[%c0_3, %c0_4] : memref<1x32xf32, #tpu.memory_space<vmem>>, vector<1x32xf32>
    %5 = vector.shape_cast %4 : vector<1x32xf32> to vector<1x1x32xf32>
    %6 = vector.broadcast %5 : vector<1x1x32xf32> to vector<8x16x32xf32>
    %7 = arith.mulf %3, %6 : vector<8x16x32xf32>
    %cst = arith.constant dense<0.000000e+00> : vector<8x16xf32>
    %8 = vector.multi_reduction <add>, %7, %cst [2] : vector<8x16x32xf32> to vector<8x16xf32>
    %c0_5 = arith.constant 0 : index
    %c0_6 = arith.constant 0 : index
    %9 = vector.load %arg5[%c0_5, %c0_6] : memref<8x1xf32, #tpu.memory_space<vmem>>, vector<8x1xf32>
    %cst_7 = arith.constant dense<0xFF800000> : vector<8xf32>
    %10 = vector.multi_reduction <maximumf>, %8, %cst_7 [1] : vector<8x16xf32> to vector<8xf32>
    %11 = vector.shape_cast %10 : vector<8xf32> to vector<8x1xf32>
    %12 = arith.maximumf %9, %11 : vector<8x1xf32>
    %13 = arith.subf %9, %12 : vector<8x1xf32>
    %14 = math.exp %13 : vector<8x1xf32>
    %15 = vector.broadcast %12 : vector<8x1xf32> to vector<8x16xf32>
    %16 = arith.subf %8, %15 : vector<8x16xf32>
    %17 = math.exp %16 : vector<8x16xf32>
    %c0_8 = arith.constant 0 : index
    %c0_9 = arith.constant 0 : index
    %18 = vector.load %arg6[%c0_8, %c0_9] : memref<8x1xf32, #tpu.memory_space<vmem>>, vector<8x1xf32>
    %19 = arith.mulf %14, %18 : vector<8x1xf32>
    %cst_10 = arith.constant dense<0.000000e+00> : vector<8xf32>
    %20 = vector.multi_reduction <add>, %17, %cst_10 [1] : vector<8x16xf32> to vector<8xf32>
    %21 = vector.shape_cast %20 : vector<8xf32> to vector<8x1xf32>
    %22 = arith.addf %19, %21 : vector<8x1xf32>
    %c0_11 = arith.constant 0 : index
    %c0_12 = arith.constant 0 : index
    %23 = vector.load %arg6[%c0_11, %c0_12] : memref<8x1xf32, #tpu.memory_space<vmem>>, vector<8x1xf32>
    tpu.vector_store %arg6[%c0_11, %c0_12], %22 {strides = array<i32>} : memref<8x1xf32, #tpu.memory_space<vmem>>, vector<8x1xf32>,
    %24 = vector.shape_cast %17 : vector<8x16xf32> to vector<8x16x1xf32>
    %25 = vector.broadcast %24 : vector<8x16x1xf32> to vector<8x16x32xf32>
    %26 = arith.mulf %3, %25 : vector<8x16x32xf32>
    %c0_13 = arith.constant 0 : index
    %c0_14 = arith.constant 0 : index
    %27 = vector.load %arg7[%c0_13, %c0_14] : memref<8x32xf32, #tpu.memory_space<vmem>>, vector<8x32xf32>
    %28 = vector.broadcast %14 : vector<8x1xf32> to vector<8x32xf32>
    %29 = arith.mulf %28, %27 : vector<8x32xf32>
    %cst_15 = arith.constant dense<0.000000e+00> : vector<8x32xf32>
    %30 = vector.multi_reduction <add>, %26, %cst_15 [1] : vector<8x16x32xf32> to vector<8x32xf32>
    %31 = arith.addf %29, %30 : vector<8x32xf32>
    %c0_16 = arith.constant 0 : index
    %c0_17 = arith.constant 0 : index
    %32 = vector.load %arg7[%c0_16, %c0_17] : memref<8x32xf32, #tpu.memory_space<vmem>>, vector<8x32xf32>
    tpu.vector_store %arg7[%c0_16, %c0_17], %31 {strides = array<i32>} : memref<8x32xf32, #tpu.memory_space<vmem>>, vector<8x32xf32>,
    %c0_18 = arith.constant 0 : index
    %c0_19 = arith.constant 0 : index
    %33 = vector.load %arg5[%c0_18, %c0_19] : memref<8x1xf32, #tpu.memory_space<vmem>>, vector<8x1xf32>
    tpu.vector_store %arg5[%c0_18, %c0_19], %12 {strides = array<i32>} : memref<8x1xf32, #tpu.memory_space<vmem>>, vector<8x1xf32>,
    %c0_i32_20 = arith.constant 0 : i32
    %34 = arith.cmpi eq, %arg1, %c0_i32_20 : i32
    %35 = arith.extui %34 : i1 to i32
    %c0_i32_21 = arith.constant 0 : i32
    %36 = arith.cmpi ne, %35, %c0_i32_21 : i32
    scf.if %36 {
      %c0_22 = arith.constant 0 : index
      %c0_23 = arith.constant 0 : index
      %37 = vector.load %arg7[%c0_22, %c0_23] : memref<8x32xf32, #tpu.memory_space<vmem>>, vector<8x32xf32>
      %c0_24 = arith.constant 0 : index
      %c0_25 = arith.constant 0 : index
      %38 = vector.load %arg6[%c0_24, %c0_25] : memref<8x1xf32, #tpu.memory_space<vmem>>, vector<8x1xf32>
      %39 = vector.broadcast %38 : vector<8x1xf32> to vector<8x32xf32>
      %40 = arith.divf %37, %39 : vector<8x32xf32>
      %c0_26 = arith.constant 0 : index
      %c0_27 = arith.constant 0 : index
      %41 = vector.load %arg4[%c0_26, %c0_27] : memref<8x32xf32, #tpu.memory_space<vmem>>, vector<8x32xf32>
      tpu.vector_store %arg4[%c0_26, %c0_27], %40 {strides = array<i32>} : memref<8x32xf32, #tpu.memory_space<vmem>>, vector<8x32xf32>,
    } else {
    }
    return
  }
  func.func @transform_0(%arg0: i32, %arg1: i32) -> (i32, i32, i32) {
    %c0_i32 = arith.constant 0 : i32
    %c0_i32_0 = arith.constant 0 : i32
    return %arg0, %arg1, %c0_i32 : i32, i32, i32
  }
  func.func @transform_1(%arg0: i32, %arg1: i32) -> (i32, i32) {
    %c0_i32 = arith.constant 0 : i32
    %c0_i32_0 = arith.constant 0 : i32
    %c0_i32_1 = arith.constant 0 : i32
    return %c0_i32, %c0_i32_0 : i32, i32
  }
  func.func @transform_2(%arg0: i32, %arg1: i32) -> (i32, i32) {
    %c0_i32 = arith.constant 0 : i32
    %c0_i32_0 = arith.constant 0 : i32
    return %arg0, %c0_i32 : i32, i32
  }
}

</mosaic_0001>

<llo_original>
// kernel: tpu_custom_call.1
$region0: #{tpu_custom_call.1}
  #allocation0 [shape = 'u32[]', space=smem, size = 0x4, offset = 0x4, fixed_abs, tag = 'smem constant byte address 0x4 - core index']
  #allocation1 [shape = 'u32[144,128]{1,0:T(1,128)}', space=vmem, size = 0x12000, scoped, tag = 'internal scratch']
  #allocation2 [shape = 'f32[8,1]{1,0:T(8,128)}', space=vmem, size = 0x1000, scoped, tag = 'scratch operand']
  #allocation3 [shape = 'f32[8,1]{1,0:T(8,128)}', space=vmem, size = 0x1000, scoped, tag = 'scratch operand']
  #allocation4 [shape = 'f32[8,32]{1,0:T(8,128)}', space=vmem, size = 0x1000, scoped, tag = 'scratch operand']
  %s0 = inlined_call_operand.hbm [shape: f32[8,16,32], index: 0, kind: input, shape index: {}]
  %s1 = inlined_call_operand.vmem [shape: f32[1,32], index: 1, kind: input, shape index: {}]
  %s2 = inlined_call_operand.hbm [shape: f32[8,32], index: 2, kind: output, shape index: {}]
  %s3 = sld [smem:[#allocation0]]
  $region30: #{tpu_custom_call.1} parent=0
    _
  %s5 = ssub.s32 1, %s3
  %s6 = scalar_select 0, %s5, %s3
  $region1: #{tpu_custom_call.1} parent=0
    #allocation5 [shape = 'u8[65536]{0}', space=vmem, size = 0x10000, scoped, tag = 'input window, operand 0, single buffered']
    #allocation6 [shape = 's32[1]{0}', space=sflag, size = 0x4, scoped, tag = 'scoped memory for tpu_custom_call.1']
    #allocation7 [shape = 's32[1]{0}', space=sflag, size = 0x4, scoped, tag = 'scoped memory for tpu_custom_call.1']
    #allocation8 [shape = 'u8[4096]{0}', space=vmem, size = 0x1000, scoped, tag = 'output window, operand 0, single buffered']
    %7 = vsyncpa [#allocation6], 0
    %8 = vsyncpa [#allocation7], 0
    // Predicated region
    $region2: #{tpu_custom_call.1} parent=1 // pred_check
      _
    $region3: #{tpu_custom_call.1} parent=1 // pred_check_branch
      %10 = sbr.rel (0) target = $region5
    $region4: #{tpu_custom_call.1} parent=1 // pred_region
      %s12 = ssub.s32 2048, 2048
      %13 = vsyncadd [#allocation6], %s12
      %s14 = sshll.u32 [#allocation5], 4
      %s15 = int_to_ptr.vmem [resolvable:$true] %s14
      %20 = dma.hbm_to_vmem [thread:$0]  %s0, 2048, %s15, [#allocation6], 128, 128, 8
    $region5: #{tpu_custom_call.1} parent=1 // pred_fallthru
      _
    // Predicated region
    $region6: #{tpu_custom_call.1} parent=1 // pred_check
      _
    $region7: #{tpu_custom_call.1} parent=1 // pred_check_branch
      %22 = sbr.rel (0) target = $region9
    $region8: #{tpu_custom_call.1} parent=1 // pred_region
      _
    $region9: #{tpu_custom_call.1} parent=1 // pred_fallthru
      _
    // Predicated region
    $region10: #{tpu_custom_call.1} parent=1 // pred_check
      _
    $region11: #{tpu_custom_call.1} parent=1 // pred_check_branch
      %24 = sbr.rel (0) target = $region13
    $region12: #{tpu_custom_call.1} parent=1 // pred_region
      %25 = dma.done [#allocation6], 2048
    $region13: #{tpu_custom_call.1} parent=1 // pred_fallthru
      _
    %p26 = scmp.eq.s32.totalorder 0, 0
    // Predicated region
    $region14: #{tpu_custom_call.1} parent=1 // pred_check
      %p27 = pneg %p26
    $region15: #{tpu_custom_call.1} parent=1 // pred_check_branch
      %29 = sbr.rel (%p27) target = $region17
    $region16: #{tpu_custom_call.1} parent=1 // pred_region
      %vm30 = vcmask 7168
      %31 = vst.msk [vmem:[#allocation2] sm:$0xff] %vm30, -inf
      %32 = vst.msk [vmem:[#allocation3] sm:$0xff] %vm30, 0.0
      %vm33 = vcmask 261120
      %34 = vst.msk [vmem:[#allocation4] sm:$0xff] %vm33, 0.0
    $region17: #{tpu_custom_call.1} parent=1 // pred_fallthru
      _
    %v35 = vld [vmem:[#allocation5] sm:$0xff]
    %v36 = vld [vmem:[#allocation5 + $0x8] sm:$0xff]
    %v37 = vld [vmem:[#allocation5 + $0x10] sm:$0xff]
    %v38 = vld [vmem:[#allocation5 + $0x18] sm:$0xff]
    %v39 = vld [vmem:[#allocation5 + $0x20] sm:$0xff]
    %v40 = vld [vmem:[#allocation5 + $0x28] sm:$0xff]
    %v41 = vld [vmem:[#allocation5 + $0x30] sm:$0xff]
    %v42 = vld [vmem:[#allocation5 + $0x38] sm:$0xff]
    %v43 = vld [vmem:[#allocation5 + $0x40] sm:$0xff]
    %v44 = vld [vmem:[#allocation5 + $0x48] sm:$0xff]
    %v45 = vld [vmem:[#allocation5 + $0x50] sm:$0xff]
    %v46 = vld [vmem:[#allocation5 + $0x58] sm:$0xff]
    %v47 = vld [vmem:[#allocation5 + $0x60] sm:$0xff]
    %v48 = vld [vmem:[#allocation5 + $0x68] sm:$0xff]
    %v49 = vld [vmem:[#allocation5 + $0x70] sm:$0xff]
    %v50 = vld [vmem:[#allocation5 + $0x78] sm:$0xff]
    %v51 = vld [vmem:[%s1] sm:$0x1]
    %v53 = vlaneseq
    %v54 = vshrl.u32 %v53, 7
    %v55 = vsub.s32 0, %v54
    %v56 = vrot.slane %v51, %v55
    %v58 = vmul.f32 %v35, %v56
    %v59 = vmul.f32 %v36, %v56
    %v60 = vmul.f32 %v37, %v56
    %v61 = vmul.f32 %v38, %v56
    %v62 = vmul.f32 %v39, %v56
    %v63 = vmul.f32 %v40, %v56
    %v64 = vmul.f32 %v41, %v56
    %v65 = vmul.f32 %v42, %v56
    %v66 = vmul.f32 %v43, %v56
    %v67 = vmul.f32 %v44, %v56
    %v68 = vmul.f32 %v45, %v56
    %v69 = vmul.f32 %v46, %v56
    %v70 = vmul.f32 %v47, %v56
    %v71 = vmul.f32 %v48, %v56
    %v72 = vmul.f32 %v49, %v56
    %v73 = vmul.f32 %v50, %v56
    %vm74 = vcmask 261120
    %v75 = vsel %vm74, %v58, 0.0
    %76 = vadd.xlane.f32.xlu0 %v75
    %v77 = vpop.xlane.xlu0 %76
    %v78 = vsel %vm74, %v59, 0.0
    %79 = vadd.xlane.f32.xlu0 %v78
    %v80 = vpop.xlane.xlu0 %79
    %v81 = vsel %vm74, %v60, 0.0
    %82 = vadd.xlane.f32.xlu0 %v81
    %v83 = vpop.xlane.xlu0 %82
    %v84 = vsel %vm74, %v61, 0.0
    %85 = vadd.xlane.f32.xlu0 %v84
    %v86 = vpop.xlane.xlu0 %85
    %v87 = vsel %vm74, %v62, 0.0
    %88 = vadd.xlane.f32.xlu0 %v87
    %v89 = vpop.xlane.xlu0 %88
    %v90 = vsel %vm74, %v63, 0.0
    %91 = vadd.xlane.f32.xlu0 %v90
    %v92 = vpop.xlane.xlu0 %91
    %v93 = vsel %vm74, %v64, 0.0
    %94 = vadd.xlane.f32.xlu0 %v93
    %v95 = vpop.xlane.xlu0 %94
    %v96 = vsel %vm74, %v65, 0.0
    %97 = vadd.xlane.f32.xlu0 %v96
    %v98 = vpop.xlane.xlu0 %97
    %v99 = vsel %vm74, %v66, 0.0
    %100 = vadd.xlane.f32.xlu0 %v99
    %v101 = vpop.xlane.xlu0 %100
    %v102 = vsel %vm74, %v67, 0.0
    %103 = vadd.xlane.f32.xlu0 %v102
    %v104 = vpop.xlane.xlu0 %103
    %v105 = vsel %vm74, %v68, 0.0
    %106 = vadd.xlane.f32.xlu0 %v105
    %v107 = vpop.xlane.xlu0 %106
    %v108 = vsel %vm74, %v69, 0.0
    %109 = vadd.xlane.f32.xlu0 %v108
    %v110 = vpop.xlane.xlu0 %109
    %v111 = vsel %vm74, %v70, 0.0
    %112 = vadd.xlane.f32.xlu0 %v111
    %v113 = vpop.xlane.xlu0 %112
    %v114 = vsel %vm74, %v71, 0.0
    %115 = vadd.xlane.f32.xlu0 %v114
    %v116 = vpop.xlane.xlu0 %115
    %v117 = vsel %vm74, %v72, 0.0
    %118 = vadd.xlane.f32.xlu0 %v117
    %v119 = vpop.xlane.xlu0 %118
    %v120 = vsel %vm74, %v73, 0.0
    %121 = vadd.xlane.f32.xlu0 %v120
    %v122 = vpop.xlane.xlu0 %121
    %v123 = vld [vmem:[#allocation2] sm:$0xff]
    %v140 = vlaneseq
    %v141 = vand.u32 %v140, 127
    %v142 = vlaneseq
    %v143 = vshrl.u32 %v142, 7
    %v144 = vsub.s32 %v141, %v143
    %v145 = vrot.slane %v77, %v144
    %v146 = vadd.s32 %v141, 4294967288
    %v147 = vlaneseq
    %v148 = vshrl.u32 %v147, 7
    %v149 = vsub.s32 %v146, %v148
    %v150 = vrot.slane %v80, %v149
    %vm151 = vcmask 130112
    %v152 = vsel %vm151, %v150, %v145
    %v153 = vlaneseq
    %v154 = vshrl.u32 %v153, 7
    %v155 = vsub.s32 %v141, %v154
    %v156 = vrot.slane %v83, %v155
    %v157 = vlaneseq
    %v158 = vshrl.u32 %v157, 7
    %v159 = vsub.s32 %v146, %v158
    %v160 = vrot.slane %v86, %v159
    %v161 = vsel %vm151, %v160, %v156
    %v162 = vlaneseq
    %v163 = vshrl.u32 %v162, 7
    %v164 = vsub.s32 %v141, %v163
    %v165 = vrot.slane %v89, %v164
    %v166 = vlaneseq
    %v167 = vshrl.u32 %v166, 7
    %v168 = vsub.s32 %v146, %v167
    %v169 = vrot.slane %v92, %v168
    %v170 = vsel %vm151, %v169, %v165
    %v171 = vlaneseq
    %v172 = vshrl.u32 %v171, 7
    %v173 = vsub.s32 %v141, %v172
    %v174 = vrot.slane %v95, %v173
    %v175 = vlaneseq
    %v176 = vshrl.u32 %v175, 7
    %v177 = vsub.s32 %v146, %v176
    %v178 = vrot.slane %v98, %v177
    %v179 = vsel %vm151, %v178, %v174
    %v180 = vlaneseq
    %v181 = vshrl.u32 %v180, 7
    %v182 = vsub.s32 %v141, %v181
    %v183 = vrot.slane %v101, %v182
    %v184 = vlaneseq
    %v185 = vshrl.u32 %v184, 7
    %v186 = vsub.s32 %v146, %v185
    %v187 = vrot.slane %v104, %v186
    %v188 = vsel %vm151, %v187, %v183
    %v189 = vlaneseq
    %v190 = vshrl.u32 %v189, 7
    %v191 = vsub.s32 %v141, %v190
    %v192 = vrot.slane %v107, %v191
    %v193 = vlaneseq
    %v194 = vshrl.u32 %v193, 7
    %v195 = vsub.s32 %v146, %v194
    %v196 = vrot.slane %v110, %v195
    %v197 = vsel %vm151, %v196, %v192
    %v198 = vlaneseq
    %v199 = vshrl.u32 %v198, 7
    %v200 = vsub.s32 %v141, %v199
    %v201 = vrot.slane %v113, %v200
    %v202 = vlaneseq
    %v203 = vshrl.u32 %v202, 7
    %v204 = vsub.s32 %v146, %v203
    %v205 = vrot.slane %v116, %v204
    %v206 = vsel %vm151, %v205, %v201
    %v207 = vlaneseq
    %v208 = vshrl.u32 %v207, 7
    %v209 = vsub.s32 %v141, %v208
    %v210 = vrot.slane %v119, %v209
    %v211 = vlaneseq
    %v212 = vshrl.u32 %v211, 7
    %v213 = vsub.s32 %v146, %v212
    %v214 = vrot.slane %v122, %v213
    %v215 = vsel %vm151, %v214, %v210
    %vm216 = vcmask 1041409
    %v217 = vsel %vm216, %v161, %v152
    %vm218 = vcmask 1042434
    %v219 = vsel %vm218, %v170, %v217
    %vm220 = vcmask 1043459
    %v221 = vsel %vm220, %v179, %v219
    %vm222 = vcmask 1044484
    %v223 = vsel %vm222, %v188, %v221
    %vm224 = vcmask 1045509
    %v225 = vsel %vm224, %v197, %v223
    %vm226 = vcmask 1046534
    %v227 = vsel %vm226, %v206, %v225
    %vm228 = vcmask 1047559
    %v229 = vsel %vm228, %v215, %v227
    %vm231 = vcmask 130048
    %v232 = vsel %vm231, %v229, -inf
    %233 = vmax.xlane.f32.xlu0 %v232
    %v234 = vpop.xlane.xlu0 %233
    %v235 = vmax.f32 %v123, %v234
    %v236 = vsub.f32 %v123, %v235
    %v237 = vmul.f32 %v236, 1.442695
    %v238 = vpow.pop %v237
    %240 = vset.pattern.permute.xlu0 0
    %241 = vperm.xlu0 %240, %v235
    %v242 = vpop.permute.xlu0 %241
    %v243 = vlaneseq
    %v244 = vshrl.u32 %v243, 7
    %v245 = vsub.s32 0, %v244
    %v246 = vrot.slane %v242, %v245
    %v247 = vlaneseq
    %v248 = vshrl.u32 %v247, 7
    %v249 = vsub.s32 1, %v248
    %v250 = vrot.slane %v242, %v249
    %v251 = vlaneseq
    %v252 = vshrl.u32 %v251, 7
    %v253 = vsub.s32 2, %v252
    %v254 = vrot.slane %v242, %v253
    %v255 = vlaneseq
    %v256 = vshrl.u32 %v255, 7
    %v257 = vsub.s32 3, %v256
    %v258 = vrot.slane %v242, %v257
    %v259 = vlaneseq
    %v260 = vshrl.u32 %v259, 7
    %v261 = vsub.s32 4, %v260
    %v262 = vrot.slane %v242, %v261
    %v263 = vlaneseq
    %v264 = vshrl.u32 %v263, 7
    %v265 = vsub.s32 5, %v264
    %v266 = vrot.slane %v242, %v265
    %v267 = vlaneseq
    %v268 = vshrl.u32 %v267, 7
    %v269 = vsub.s32 6, %v268
    %v270 = vrot.slane %v242, %v269
    %v271 = vlaneseq
    %v272 = vshrl.u32 %v271, 7
    %v273 = vsub.s32 7, %v272
    %v274 = vrot.slane %v242, %v273
    %v283 = vsub.f32 %v77, %v246
    %v284 = vsub.f32 %v80, %v246
    %v285 = vsub.f32 %v83, %v250
    %v286 = vsub.f32 %v86, %v250
    %v287 = vsub.f32 %v89, %v254
    %v288 = vsub.f32 %v92, %v254
    %v289 = vsub.f32 %v95, %v258
    %v290 = vsub.f32 %v98, %v258
    %v291 = vsub.f32 %v101, %v262
    %v292 = vsub.f32 %v104, %v262
    %v293 = vsub.f32 %v107, %v266
    %v294 = vsub.f32 %v110, %v266
    %v295 = vsub.f32 %v113, %v270
    %v296 = vsub.f32 %v116, %v270
    %v297 = vsub.f32 %v119, %v274
    %v298 = vsub.f32 %v122, %v274
    %v299 = vmul.f32 %v283, 1.442695
    %v300 = vpow.pop %v299
    %v301 = vmul.f32 %v284, 1.442695
    %v302 = vpow.pop %v301
    %v303 = vmul.f32 %v285, 1.442695
    %v304 = vpow.pop %v303
    %v305 = vmul.f32 %v286, 1.442695
    %v306 = vpow.pop %v305
    %v307 = vmul.f32 %v287, 1.442695
    %v308 = vpow.pop %v307
    %v309 = vmul.f32 %v288, 1.442695
    %v310 = vpow.pop %v309
    %v311 = vmul.f32 %v289, 1.442695
    %v312 = vpow.pop %v311
    %v313 = vmul.f32 %v290, 1.442695
    %v314 = vpow.pop %v313
    %v315 = vmul.f32 %v291, 1.442695
    %v316 = vpow.pop %v315
    %v317 = vmul.f32 %v292, 1.442695
    %v318 = vpow.pop %v317
    %v319 = vmul.f32 %v293, 1.442695
    %v320 = vpow.pop %v319
    %v321 = vmul.f32 %v294, 1.442695
    %v322 = vpow.pop %v321
    %v323 = vmul.f32 %v295, 1.442695
    %v324 = vpow.pop %v323
    %v325 = vmul.f32 %v296, 1.442695
    %v326 = vpow.pop %v325
    %v327 = vmul.f32 %v297, 1.442695
    %v328 = vpow.pop %v327
    %v329 = vmul.f32 %v298, 1.442695
    %v330 = vpow.pop %v329
    %v331 = vld [vmem:[#allocation3] sm:$0xff]
    %v332 = vmul.f32 %v238, %v331
    %349 = vset.pattern.permute.xlu0 0
    %350 = vperm.xlu0 %349, %v300
    %v351 = vpop.permute.xlu0 %350
    %352 = vset.pattern.permute.xlu0 0
    %353 = vperm.xlu0 %352, %v302
    %v354 = vpop.permute.xlu0 %353
    %355 = vset.pattern.permute.xlu0 0
    %356 = vperm.xlu0 %355, %v304
    %v357 = vpop.permute.xlu0 %356
    %358 = vset.pattern.permute.xlu0 0
    %359 = vperm.xlu0 %358, %v306
    %v360 = vpop.permute.xlu0 %359
    %361 = vset.pattern.permute.xlu0 0
    %362 = vperm.xlu0 %361, %v308
    %v363 = vpop.permute.xlu0 %362
    %364 = vset.pattern.permute.xlu0 0
    %365 = vperm.xlu0 %364, %v310
    %v366 = vpop.permute.xlu0 %365
    %367 = vset.pattern.permute.xlu0 0
    %368 = vperm.xlu0 %367, %v312
    %v369 = vpop.permute.xlu0 %368
    %370 = vset.pattern.permute.xlu0 0
    %371 = vperm.xlu0 %370, %v314
    %v372 = vpop.permute.xlu0 %371
    %373 = vset.pattern.permute.xlu0 0
    %374 = vperm.xlu0 %373, %v316
    %v375 = vpop.permute.xlu0 %374
    %376 = vset.pattern.permute.xlu0 0
    %377 = vperm.xlu0 %376, %v318
    %v378 = vpop.permute.xlu0 %377
    %379 = vset.pattern.permute.xlu0 0
    %380 = vperm.xlu0 %379, %v320
    %v381 = vpop.permute.xlu0 %380
    %382 = vset.pattern.permute.xlu0 0
    %383 = vperm.xlu0 %382, %v322
    %v384 = vpop.permute.xlu0 %383
    %385 = vset.pattern.permute.xlu0 0
    %386 = vperm.xlu0 %385, %v324
    %v387 = vpop.permute.xlu0 %386
    %388 = vset.pattern.permute.xlu0 0
    %389 = vperm.xlu0 %388, %v326
    %v390 = vpop.permute.xlu0 %389
    %391 = vset.pattern.permute.xlu0 0
    %392 = vperm.xlu0 %391, %v328
    %v393 = vpop.permute.xlu0 %392
    %394 = vset.pattern.permute.xlu0 0
    %395 = vperm.xlu0 %394, %v330
    %v396 = vpop.permute.xlu0 %395
    %v397 = vlaneseq
    %v398 = vshrl.u32 %v397, 7
    %v399 = vsub.s32 %v141, %v398
    %v400 = vrot.slane %v351, %v399
    %v401 = vlaneseq
    %v402 = vshrl.u32 %v401, 7
    %v403 = vsub.s32 %v146, %v402
    %v404 = vrot.slane %v354, %v403
    %v405 = vsel %vm151, %v404, %v400
    %v406 = vlaneseq
    %v407 = vshrl.u32 %v406, 7
    %v408 = vsub.s32 %v141, %v407
    %v409 = vrot.slane %v357, %v408
    %v410 = vlaneseq
    %v411 = vshrl.u32 %v410, 7
    %v412 = vsub.s32 %v146, %v411
    %v413 = vrot.slane %v360, %v412
    %v414 = vsel %vm151, %v413, %v409
    %v415 = vlaneseq
    %v416 = vshrl.u32 %v415, 7
    %v417 = vsub.s32 %v141, %v416
    %v418 = vrot.slane %v363, %v417
    %v419 = vlaneseq
    %v420 = vshrl.u32 %v419, 7
    %v421 = vsub.s32 %v146, %v420
    %v422 = vrot.slane %v366, %v421
    %v423 = vsel %vm151, %v422, %v418
    %v424 = vlaneseq
    %v425 = vshrl.u32 %v424, 7
    %v426 = vsub.s32 %v141, %v425
    %v427 = vrot.slane %v369, %v426
    %v428 = vlaneseq
    %v429 = vshrl.u32 %v428, 7
    %v430 = vsub.s32 %v146, %v429
    %v431 = vrot.slane %v372, %v430
    %v432 = vsel %vm151, %v431, %v427
    %v433 = vlaneseq
    %v434 = vshrl.u32 %v433, 7
    %v435 = vsub.s32 %v141, %v434
    %v436 = vrot.slane %v375, %v435
    %v437 = vlaneseq
    %v438 = vshrl.u32 %v437, 7
    %v439 = vsub.s32 %v146, %v438
    %v440 = vrot.slane %v378, %v439
    %v441 = vsel %vm151, %v440, %v436
    %v442 = vlaneseq
    %v443 = vshrl.u32 %v442, 7
    %v444 = vsub.s32 %v141, %v443
    %v445 = vrot.slane %v381, %v444
    %v446 = vlaneseq
    %v447 = vshrl.u32 %v446, 7
    %v448 = vsub.s32 %v146, %v447
    %v449 = vrot.slane %v384, %v448
    %v450 = vsel %vm151, %v449, %v445
    %v451 = vlaneseq
    %v452 = vshrl.u32 %v451, 7
    %v453 = vsub.s32 %v141, %v452
    %v454 = vrot.slane %v387, %v453
    %v455 = vlaneseq
    %v456 = vshrl.u32 %v455, 7
    %v457 = vsub.s32 %v146, %v456
    %v458 = vrot.slane %v390, %v457
    %v459 = vsel %vm151, %v458, %v454
    %v460 = vlaneseq
    %v461 = vshrl.u32 %v460, 7
    %v462 = vsub.s32 %v141, %v461
    %v463 = vrot.slane %v393, %v462
    %v464 = vlaneseq
    %v465 = vshrl.u32 %v464, 7
    %v466 = vsub.s32 %v146, %v465
    %v467 = vrot.slane %v396, %v466
    %v468 = vsel %vm151, %v467, %v463
    %v469 = vsel %vm216, %v414, %v405
    %v470 = vsel %vm218, %v423, %v469
    %v471 = vsel %vm220, %v432, %v470
    %v472 = vsel %vm222, %v441, %v471
    %v473 = vsel %vm224, %v450, %v472
    %v474 = vsel %vm226, %v459, %v473
    %v475 = vsel %vm228, %v468, %v474
    %v477 = vsel %vm231, %v475, 0.0
    %478 = vadd.xlane.f32.xlu0 %v477
    %v479 = vpop.xlane.xlu0 %478
    %v480 = vadd.f32 %v332, %v479
    %vm481 = vcmask 7168
    %482 = vst.msk [vmem:[#allocation3] sm:$0xff] %vm481, %v480
    %v499 = vmul.f32 %v35, %v351
    %v500 = vmul.f32 %v36, %v354
    %v501 = vmul.f32 %v37, %v357
    %v502 = vmul.f32 %v38, %v360
    %v503 = vmul.f32 %v39, %v363
    %v504 = vmul.f32 %v40, %v366
    %v505 = vmul.f32 %v41, %v369
    %v506 = vmul.f32 %v42, %v372
    %v507 = vmul.f32 %v43, %v375
    %v508 = vmul.f32 %v44, %v378
    %v509 = vmul.f32 %v45, %v381
    %v510 = vmul.f32 %v46, %v384
    %v511 = vmul.f32 %v47, %v387
    %v512 = vmul.f32 %v48, %v390
    %v513 = vmul.f32 %v49, %v393
    %v514 = vmul.f32 %v50, %v396
    %v515 = vld [vmem:[#allocation4] sm:$0xff]
    %517 = vset.pattern.permute.xlu0 0
    %518 = vperm.xlu0 %517, %v238
    %v519 = vpop.permute.xlu0 %518
    %v521 = vmul.f32 %v519, %v515
    %v522 = vsel %vm74, %v499, 0.0
    %v523 = vsel %vm74, %v500, 0.0
    %v524 = vadd.f32 %v522, %v523
    %v525 = vrot.slane %v524, 4
    %v526 = vadd.f32 %v524, %v525
    %v527 = vrot.slane %v526, 2
    %v528 = vadd.f32 %v526, %v527
    %v529 = vrot.slane %v528, 1
    %v530 = vadd.f32 %v528, %v529
    %v531 = vsel %vm74, %v501, 0.0
    %v532 = vsel %vm74, %v502, 0.0
    %v533 = vadd.f32 %v531, %v532
    %v534 = vrot.slane %v533, 4
    %v535 = vadd.f32 %v533, %v534
    %v536 = vrot.slane %v535, 2
    %v537 = vadd.f32 %v535, %v536
    %v538 = vrot.slane %v537, 1
    %v539 = vadd.f32 %v537, %v538
    %v540 = vsel %vm74, %v503, 0.0
    %v541 = vsel %vm74, %v504, 0.0
    %v542 = vadd.f32 %v540, %v541
    %v543 = vrot.slane %v542, 4
    %v544 = vadd.f32 %v542, %v543
    %v545 = vrot.slane %v544, 2
    %v546 = vadd.f32 %v544, %v545
    %v547 = vrot.slane %v546, 1
    %v548 = vadd.f32 %v546, %v547
    %v549 = vsel %vm74, %v505, 0.0
    %v550 = vsel %vm74, %v506, 0.0
    %v551 = vadd.f32 %v549, %v550
    %v552 = vrot.slane %v551, 4
    %v553 = vadd.f32 %v551, %v552
    %v554 = vrot.slane %v553, 2
    %v555 = vadd.f32 %v553, %v554
    %v556 = vrot.slane %v555, 1
    %v557 = vadd.f32 %v555, %v556
    %v558 = vsel %vm74, %v507, 0.0
    %v559 = vsel %vm74, %v508, 0.0
    %v560 = vadd.f32 %v558, %v559
    %v561 = vrot.slane %v560, 4
    %v562 = vadd.f32 %v560, %v561
    %v563 = vrot.slane %v562, 2
    %v564 = vadd.f32 %v562, %v563
    %v565 = vrot.slane %v564, 1
    %v566 = vadd.f32 %v564, %v565
    %v567 = vsel %vm74, %v509, 0.0
    %v568 = vsel %vm74, %v510, 0.0
    %v569 = vadd.f32 %v567, %v568
    %v570 = vrot.slane %v569, 4
    %v571 = vadd.f32 %v569, %v570
    %v572 = vrot.slane %v571, 2
    %v573 = vadd.f32 %v571, %v572
    %v574 = vrot.slane %v573, 1
    %v575 = vadd.f32 %v573, %v574
    %v576 = vsel %vm74, %v511, 0.0
    %v577 = vsel %vm74, %v512, 0.0
    %v578 = vadd.f32 %v576, %v577
    %v579 = vrot.slane %v578, 4
    %v580 = vadd.f32 %v578, %v579
    %v581 = vrot.slane %v580, 2
    %v582 = vadd.f32 %v580, %v581
    %v583 = vrot.slane %v582, 1
    %v584 = vadd.f32 %v582, %v583
    %v585 = vsel %vm74, %v513, 0.0
    %v586 = vsel %vm74, %v514, 0.0
    %v587 = vadd.f32 %v585, %v586
    %v588 = vrot.slane %v587, 4
    %v589 = vadd.f32 %v587, %v588
    %v590 = vrot.slane %v589, 2
    %v591 = vadd.f32 %v589, %v590
    %v592 = vrot.slane %v591, 1
    %v593 = vadd.f32 %v591, %v592
    %v602 = vsel %vm216, %v539, %v530
    %v603 = vsel %vm218, %v548, %v602
    %v604 = vsel %vm220, %v557, %v603
    %v605 = vsel %vm222, %v566, %v604
    %v606 = vsel %vm224, %v575, %v605
    %v607 = vsel %vm226, %v584, %v606
    %v608 = vsel %vm228, %v593, %v607
    %v610 = vadd.f32 %v521, %v608
    %611 = vst.msk [vmem:[#allocation4] sm:$0xff] %vm74, %v610
    %612 = vst.msk [vmem:[#allocation2] sm:$0xff] %vm481, %v235
    // Predicated region
    $region18: #{tpu_custom_call.1} parent=1 // pred_check
      %p613 = pneg %p26
    $region19: #{tpu_custom_call.1} parent=1 // pred_check_branch
      %615 = sbr.rel (%p613) target = $region21
    $region20: #{tpu_custom_call.1} parent=1 // pred_region
      %v616 = vld [vmem:[#allocation4] sm:$0xff]
      %v617 = vld [vmem:[#allocation3] sm:$0xff]
      %619 = vset.pattern.permute.xlu0 0
      %620 = vperm.xlu0 %619, %v617
      %v621 = vpop.permute.xlu0 %620
      %v623 = vrcp.pop %v621
      %v624 = vmul.f32 %v616, %v623
      %625 = vst.msk [vmem:[#allocation8] sm:$0xff] %vm74, %v624
    $region21: #{tpu_custom_call.1} parent=1 // pred_fallthru
      _
    // Predicated region
    $region22: #{tpu_custom_call.1} parent=1 // pred_check
      _
    $region23: #{tpu_custom_call.1} parent=1 // pred_check_branch
      %627 = sbr.rel (0) target = $region25
    $region24: #{tpu_custom_call.1} parent=1 // pred_region
      %s629 = ssub.s32 128, 128
      %630 = vsyncadd [#allocation7], %s629
      %s632 = sshll.u32 [#allocation8], 4
      %s633 = int_to_ptr.vmem [resolvable:$true] %s632
      %635 = dma.vmem_to_hbm [thread:$0]  %s633, 128, %s2, [#allocation7]
    $region25: #{tpu_custom_call.1} parent=1 // pred_fallthru
      _
    // Predicated region
    $region26: #{tpu_custom_call.1} parent=1 // pred_check
      _
    $region27: #{tpu_custom_call.1} parent=1 // pred_check_branch
      %637 = sbr.rel (0) target = $region29
    $region28: #{tpu_custom_call.1} parent=1 // pred_region
      %638 = dma.done [#allocation7], 128
    $region29: #{tpu_custom_call.1} parent=1 // pred_fallthru
      _
    %639 = vsyncpa [#allocation6], 1
    %640 = vsyncpa [#allocation7], 1

</llo_original>
